<compile_context>
chip_gen: v7x
topology: tpu7x:2x2x1
jax: 0.10.0
libtpu: 0.0.40
codegen_flags: <defaults>
</compile_context>

<pallas_src>
import numpy as np
import jax
import jax.numpy as jnp
from jax.experimental import pallas as pl
from jax.experimental.pallas import tpu as pltpu


def _round_up(x, m):
    return ((x + m - 1) // m) * m


def _quat_helper_mats():
    """S, T: (4,16) so (q@S)*(q@T) puts q_i*q_j at column 4*i+j.
    C: (16,16) maps those products to the 9 row-major rotation entries
    (cols 0..8), cols 9..15 zero (reserved for translation)."""
    S = np.zeros((4, 16), np.float32)
    T = np.zeros((4, 16), np.float32)
    for i in range(4):
        for j in range(4):
            S[i, 4 * i + j] = 1.0
            T[j, 4 * i + j] = 1.0
    C = np.zeros((16, 16), np.float32)
    X, Y, Z, W = 0, 1, 2, 3                     # DCP quat order [x, y, z, w]
    idx = lambda i, j: 4 * i + j
    x2, y2, z2, w2 = idx(X, X), idx(Y, Y), idx(Z, Z), idx(W, W)
    xy, xz, wx = idx(X, Y), idx(X, Z), idx(X, W)
    yz, wy, wz = idx(Y, Z), idx(Y, W), idx(Z, W)
    C[[w2, x2, y2, z2], 0] = [1, 1, -1, -1]     # R00 = w2+x2-y2-z2
    C[[xy, wz], 1] = [2, -2]                    # R01 = 2xy-2wz
    C[[wy, xz], 2] = [2, 2]                     # R02 = 2wy+2xz
    C[[wz, xy], 3] = [2, 2]                     # R10 = 2wz+2xy
    C[[w2, x2, y2, z2], 4] = [1, -1, 1, -1]     # R11 = w2-x2+y2-z2
    C[[yz, wx], 5] = [2, -2]                    # R12 = 2yz-2wx
    C[[xz, wy], 6] = [2, -2]                    # R20 = 2xz-2wy
    C[[wx, yz], 7] = [2, 2]                     # R21 = 2wx+2yz
    C[[w2, x2, y2, z2], 8] = [1, -1, -1, 1]     # R22 = w2-x2-y2+z2
    return S, T, C


def pack_params(p, E):
    """Pack every parameter + quat constants into one (R, Wmax) f32 slab.
    Each segment is 8-row (sublane) aligned; returns (slab, row_offsets, Wmax)."""
    E2, E4, E8 = E // 2, E // 4, E // 8
    Wmax = max(E2, 16)
    S, T, C = _quat_helper_mats()
    wt16 = jnp.zeros((E8, 16), jnp.float32).at[:, 9:12].set(p["wt"])
    bt16 = jnp.zeros((1, 16), jnp.float32).at[:, 9:12].set(p["bt"])
    segs = [
        ("w1a", p["w1"][:E]), ("w1b", p["w1"][E:]),
        ("w2", p["w2"]), ("w3", p["w3"]),
        ("wr", p["wr"]), ("wt16", wt16),
        ("S", jnp.asarray(S)), ("T", jnp.asarray(T)), ("C", jnp.asarray(C)),
        ("b1", p["b1"]), ("g1", p["g1"]), ("be1", p["be1"]),
        ("b2", p["b2"]), ("g2", p["g2"]), ("be2", p["be2"]),
        ("b3", p["b3"]), ("g3", p["g3"]), ("be3", p["be3"]),
        ("br", p["br"]), ("bt16", bt16),
    ]
    off, padded, row = {}, [], 0
    for name, arr in segs:
        arr = jnp.asarray(arr, jnp.float32)
        r, c = arr.shape
        rp = _round_up(r, 8)
        off[name] = row
        row += rp
        padded.append(jnp.pad(arr, ((0, rp - r), (0, Wmax - c))))
    slab = jnp.concatenate(padded, axis=0)
    return slab, off, Wmax


def make_kernel(E, off):
    E2, E4, E8 = E // 2, E // 4, E // 8
    f32 = jnp.float32

    def bn_relu(x, g, b, eps=1e-5):
        # nn.BatchNorm1d training-mode (batch stats, biased variance)
        m = jnp.mean(x, axis=0, keepdims=True)
        v = jnp.mean((x - m) ** 2, axis=0, keepdims=True)
        return jnp.maximum((x - m) * jax.lax.rsqrt(v + eps) * g + b, 0.0)

    def kernel(p_ref, src_ref, tgt_ref, out_ref, smax_ref, tmax_ref):
        n = pl.program_id(0)

        @pl.when(n == 0)
        def _init():
            neg = jnp.full(smax_ref.shape, -jnp.inf, smax_ref.dtype)
            smax_ref[...] = neg
            tmax_ref[...] = neg

        # Streamed max over points (sublane reduce; E stays on lanes).
        smax_ref[...] = jnp.maximum(smax_ref[...], jnp.max(src_ref[...], axis=1))
        tmax_ref[...] = jnp.maximum(tmax_ref[...], jnp.max(tgt_ref[...], axis=1))

        @pl.when(n == pl.num_programs(0) - 1)
        def _finalize():
            row = lambda name, w: p_ref[off[name]:off[name] + 1, 0:w]

            # layer 1: split w1 -> no lane concat of [src_max, tgt_max]
            h = (jnp.dot(smax_ref[...], p_ref[off["w1a"]:off["w1a"] + E, 0:E2],
                         preferred_element_type=f32)
                 + jnp.dot(tmax_ref[...], p_ref[off["w1b"]:off["w1b"] + E, 0:E2],
                           preferred_element_type=f32)
                 + row("b1", E2))
            h = bn_relu(h, row("g1", E2), row("be1", E2))
            h = jnp.dot(h, p_ref[off["w2"]:off["w2"] + E2, 0:E4],
                        preferred_element_type=f32) + row("b2", E4)
            h = bn_relu(h, row("g2", E4), row("be2", E4))
            h = jnp.dot(h, p_ref[off["w3"]:off["w3"] + E4, 0:E8],
                        preferred_element_type=f32) + row("b3", E8)
            h = bn_relu(h, row("g3", E8), row("be3", E8))              # (B, E/8)

            # rotation head -> unnormalized quaternion (DCP order [x, y, z, w])
            q = jnp.dot(h, p_ref[off["wr"]:off["wr"] + E8, 0:4],
                        preferred_element_type=f32) + row("br", 4)
            # outer products on the MXU instead of 8 slices + 9-way lane concat
            qs = jnp.dot(q, p_ref[off["S"]:off["S"] + 4, 0:16],
                         preferred_element_type=f32)
            qt = jnp.dot(q, p_ref[off["T"]:off["T"] + 4, 0:16],
                         preferred_element_type=f32)
            qq = qs * qt                                  # q_i*q_j at col 4i+j
            ss = jnp.sum(q * q, axis=1, keepdims=True)    # |q|^2

            # merged lane-dense output: rot in cols 0..8, trans in 9..11, pad 12..15
            rot16 = jnp.dot(qq, p_ref[off["C"]:off["C"] + 16, 0:16],
                            preferred_element_type=f32) / ss
            tr16 = jnp.dot(h, p_ref[off["wt16"]:off["wt16"] + E8, 0:16],
                           preferred_element_type=f32) + row("bt16", 16)
            out_ref[...] = rot16 + tr16

    return kernel


def mlp_head(src, tgt, params):
    """src, tgt: (B, E, N) float32 (PyTorch NCW). Returns ((B,3,3) rot, (B,3) trans)."""
    B, E, N = src.shape
    assert tgt.shape == (B, E, N)
    slab, off, Wmax = pack_params(params, E)
    R = slab.shape[0]

    # E on the 128-lane axis; points streamed on the grid axis.
    src_t = jnp.transpose(src, (0, 2, 1))      # (B, N, E)
    tgt_t = jnp.transpose(tgt, (0, 2, 1))

    # point tile: multiple of 8 sublanes (or the full axis)
    tn = N
    for cand in (512, 256, 128, 64, 32, 16, 8):
        if N % cand == 0:
            tn = cand
            break
    n_steps = N // tn

    kernel = make_kernel(E, off)

    est = 4 * (4 * B * tn * E + R * Wmax + 2 * B * E + B * 16) + (2 << 20)
    vmem_limit = int(min(max(est, 8 << 20), 32 << 20))

    out16 = pl.pallas_call(
        kernel,
        out_shape=jax.ShapeDtypeStruct((B, 16), jnp.float32),
        grid_spec=pltpu.PrefetchScalarGridSpec(
            num_scalar_prefetch=0,
            grid=(n_steps,),
            in_specs=[
                pl.BlockSpec((R, Wmax), lambda n: (0, 0)),      # param slab: 1 DMA
                pl.BlockSpec((B, tn, E), lambda n: (0, n, 0)),  # src stream
                pl.BlockSpec((B, tn, E), lambda n: (0, n, 0)),  # tgt stream
            ],
            out_specs=pl.BlockSpec((B, 16), lambda n: (0, 0)),
            scratch_shapes=[pltpu.VMEM((B, E), jnp.float32),    # running src max
                            pltpu.VMEM((B, E), jnp.float32)],   # running tgt max
        ),
        compiler_params=pltpu.CompilerParams(
            dimension_semantics=("arbitrary",),
            vmem_limit_bytes=vmem_limit),
    )(slab, src_t, tgt_t)

    rot = out16[:, :9].reshape(B, 3, 3)
    trans = out16[:, 9:12]
    return rot, trans


def mlp_head_ref(src, tgt, p):
    """Pure-JAX reference mirroring the PyTorch forward."""
    hp = jax.lax.Precision.HIGHEST
    feat = jnp.concatenate([src, tgt], axis=1).max(axis=-1)

    def bn_relu(x, g, b):
        m = x.mean(0, keepdims=True)
        v = ((x - m) ** 2).mean(0, keepdims=True)
        return jnp.maximum((x - m) / jnp.sqrt(v + 1e-5) * g + b, 0.0)

    h = bn_relu(jnp.dot(feat, p["w1"], precision=hp) + p["b1"], p["g1"], p["be1"])
    h = bn_relu(jnp.dot(h, p["w2"], precision=hp) + p["b2"], p["g2"], p["be2"])
    h = bn_relu(jnp.dot(h, p["w3"], precision=hp) + p["b3"], p["g3"], p["be3"])
    q = jnp.dot(h, p["wr"], precision=hp) + p["br"]
    q = q / jnp.linalg.norm(q, axis=1, keepdims=True)
    t = jnp.dot(h, p["wt"], precision=hp) + p["bt"]
    x, y, z, w = q[:, 0], q[:, 1], q[:, 2], q[:, 3]
    w2, x2, y2, z2 = w * w, x * x, y * y, z * z
    wx, wy, wz = w * x, w * y, w * z
    xy, xz, yz = x * y, x * z, y * z
    R = jnp.stack([
        w2 + x2 - y2 - z2, 2 * xy - 2 * wz, 2 * wy + 2 * xz,
        2 * wz + 2 * xy, w2 - x2 + y2 - z2, 2 * yz - 2 * wx,
        2 * xz - 2 * wy, 2 * wx + 2 * yz, w2 - x2 - y2 + z2], axis=1).reshape(-1, 3, 3)
    return R, t


def init_params(key, emb_dims):
    E = emb_dims
    ks = jax.random.split(key, 10)

    def lin(k, fan_in, fan_out):
        bound = 1.0 / (fan_in ** 0.5)
        kw, kb = jax.random.split(k)
        w = jax.random.uniform(kw, (fan_in, fan_out), jnp.float32, -bound, bound)
        b = jax.random.uniform(kb, (1, fan_out), jnp.float32, -bound, bound)
        return w, b

    w1, b1 = lin(ks[0], 2 * E, E // 2)
    w2, b2 = lin(ks[1], E // 2, E // 4)
    w3, b3 = lin(ks[2], E // 4, E // 8)
    wr, br = lin(ks[3], E // 8, 4)
    wt, bt = lin(ks[4], E // 8, 3)
    ones = lambda n: jnp.ones((1, n), jnp.float32)
    zeros = lambda n: jnp.zeros((1, n), jnp.float32)
    return {
        "w1": w1, "b1": b1, "g1": ones(E // 2), "be1": zeros(E // 2),
        "w2": w2, "b2": b2, "g2": ones(E // 4), "be2": zeros(E // 4),
        "w3": w3, "b3": b3, "g3": ones(E // 8), "be3": zeros(E // 8),
        "wr": wr, "br": br, "wt": wt, "bt": bt,
    }


if __name__ == "__main__":
    E, B, N = 32, 2, 16   # emb_dims=32, batch=2, num_points=16
    key = jax.random.PRNGKey(0)
    k_src, k_tgt, k_par = jax.random.split(key, 3)
    src = jax.random.normal(k_src, (B, E, N), jnp.float32)
    tgt = jax.random.normal(k_tgt, (B, E, N), jnp.float32)
    params = init_params(k_par, E)

    rot, trans = mlp_head(src, tgt, params)
    jax.block_until_ready((rot, trans))

    rot_ref, trans_ref = mlp_head_ref(src, tgt, params)
    assert rot.shape == (B, 3, 3) and trans.shape == (B, 3)
    assert jnp.allclose(rot, rot_ref, rtol=1e-3, atol=1e-3), float(jnp.abs(rot - rot_ref).max())
    assert jnp.allclose(trans, trans_ref, rtol=1e-3, atol=1e-3)
    print("KERNEL_OK")
</pallas_src>

<mosaic_0001>
module attributes {stable_mosaic.version = 11 : i64} {
  func.func @kernel(%arg0: i32, %arg1: memref<224x16xf32, #tpu.memory_space<vmem>>, %arg2: memref<2x16x32xf32, #tpu.memory_space<vmem>>, %arg3: memref<2x16x32xf32, #tpu.memory_space<vmem>>, %arg4: memref<2x16xf32, #tpu.memory_space<vmem>>, %arg5: memref<2x32xf32, #tpu.memory_space<vmem>>, %arg6: memref<2x32xf32, #tpu.memory_space<vmem>>) attributes {dimension_semantics = [#tpu.dimension_semantics<arbitrary>], iteration_bounds = array<i64: 1>, scalar_prefetch = 0 : i64, scratch_operands = 2 : i64, tpu.core_type = #tpu.core_type<tc>, window_params = [{pipeline_mode = #tpu.pipeline_mode<synchronous>, transform_indices = @transform_0, window_bounds = array<i64: 224, 16>}, {transform_indices = @transform_1, window_bounds = array<i64: 2, 16, 32>}, {transform_indices = @transform_2, window_bounds = array<i64: 2, 16, 32>}, {pipeline_mode = #tpu.pipeline_mode<synchronous>, transform_indices = @transform_3, window_bounds = array<i64: 2, 16>}]} {
    %c0_i32 = arith.constant 0 : i32
    %0 = arith.cmpi eq, %arg0, %c0_i32 : i32
    %1 = arith.extui %0 : i1 to i32
    %c0_i32_0 = arith.constant 0 : i32
    %2 = arith.cmpi ne, %1, %c0_i32_0 : i32
    scf.if %2 {
      %cst_17 = arith.constant 0xFF800000 : f32
      %16 = vector.broadcast %cst_17 : f32 to vector<2x32xf32>
      %c0_18 = arith.constant 0 : index
      %c0_19 = arith.constant 0 : index
      %17 = vector.load %arg5[%c0_18, %c0_19] : memref<2x32xf32, #tpu.memory_space<vmem>>, vector<2x32xf32>
      tpu.vector_store %arg5[%c0_18, %c0_19], %16 {strides = array<i32>} : memref<2x32xf32, #tpu.memory_space<vmem>>, vector<2x32xf32>,
      %c0_20 = arith.constant 0 : index
      %c0_21 = arith.constant 0 : index
      %18 = vector.load %arg6[%c0_20, %c0_21] : memref<2x32xf32, #tpu.memory_space<vmem>>, vector<2x32xf32>
      tpu.vector_store %arg6[%c0_20, %c0_21], %16 {strides = array<i32>} : memref<2x32xf32, #tpu.memory_space<vmem>>, vector<2x32xf32>,
    } else {
    }
    %c0 = arith.constant 0 : index
    %c0_1 = arith.constant 0 : index
    %3 = vector.load %arg5[%c0, %c0_1] : memref<2x32xf32, #tpu.memory_space<vmem>>, vector<2x32xf32>
    %c0_2 = arith.constant 0 : index
    %c0_3 = arith.constant 0 : index
    %c0_4 = arith.constant 0 : index
    %4 = vector.load %arg2[%c0_2, %c0_3, %c0_4] : memref<2x16x32xf32, #tpu.memory_space<vmem>>, vector<2x16x32xf32>
    %cst = arith.constant dense<0xFF800000> : vector<2x32xf32>
    %5 = vector.multi_reduction <maximumf>, %4, %cst [1] : vector<2x16x32xf32> to vector<2x32xf32>
    %6 = arith.maximumf %3, %5 : vector<2x32xf32>
    %c0_5 = arith.constant 0 : index
    %c0_6 = arith.constant 0 : index
    %7 = vector.load %arg5[%c0_5, %c0_6] : memref<2x32xf32, #tpu.memory_space<vmem>>, vector<2x32xf32>
    tpu.vector_store %arg5[%c0_5, %c0_6], %6 {strides = array<i32>} : memref<2x32xf32, #tpu.memory_space<vmem>>, vector<2x32xf32>,
    %c0_7 = arith.constant 0 : index
    %c0_8 = arith.constant 0 : index
    %8 = vector.load %arg6[%c0_7, %c0_8] : memref<2x32xf32, #tpu.memory_space<vmem>>, vector<2x32xf32>
    %c0_9 = arith.constant 0 : index
    %c0_10 = arith.constant 0 : index
    %c0_11 = arith.constant 0 : index
    %9 = vector.load %arg3[%c0_9, %c0_10, %c0_11] : memref<2x16x32xf32, #tpu.memory_space<vmem>>, vector<2x16x32xf32>
    %cst_12 = arith.constant dense<0xFF800000> : vector<2x32xf32>
    %10 = vector.multi_reduction <maximumf>, %9, %cst_12 [1] : vector<2x16x32xf32> to vector<2x32xf32>
    %11 = arith.maximumf %8, %10 : vector<2x32xf32>
    %c0_13 = arith.constant 0 : index
    %c0_14 = arith.constant 0 : index
    %12 = vector.load %arg6[%c0_13, %c0_14] : memref<2x32xf32, #tpu.memory_space<vmem>>, vector<2x32xf32>
    tpu.vector_store %arg6[%c0_13, %c0_14], %11 {strides = array<i32>} : memref<2x32xf32, #tpu.memory_space<vmem>>, vector<2x32xf32>,
    %c0_i32_15 = arith.constant 0 : i32
    %13 = arith.cmpi eq, %arg0, %c0_i32_15 : i32
    %14 = arith.extui %13 : i1 to i32
    %c0_i32_16 = arith.constant 0 : i32
    %15 = arith.cmpi ne, %14, %c0_i32_16 : i32
    scf.if %15 {
      %c0_17 = arith.constant 0 : index
      %c0_18 = arith.constant 0 : index
      %16 = vector.load %arg5[%c0_17, %c0_18] : memref<2x32xf32, #tpu.memory_space<vmem>>, vector<2x32xf32>
      %c0_19 = arith.constant 0 : index
      %c0_20 = arith.constant 0 : index
      %17 = vector.load %arg1[%c0_19, %c0_20] : memref<224x16xf32, #tpu.memory_space<vmem>>, vector<32x16xf32>
      %cst_21 = arith.constant dense<0.000000e+00> : vector<2x16xf32>
      %18 = tpu.matmul %16, %17, %cst_21 {dimension_numbers = #tpu.dot_dimension_numbers<[1], [0], [0], [1], [0, 0, 1, 1], [], []>} : vector<2x32xf32>, vector<32x16xf32>, vector<2x16xf32> -> vector<2x16xf32>
      %c0_22 = arith.constant 0 : index
      %c0_23 = arith.constant 0 : index
      %19 = vector.load %arg6[%c0_22, %c0_23] : memref<2x32xf32, #tpu.memory_space<vmem>>, vector<2x32xf32>
      %c32 = arith.constant 32 : index
      %c0_24 = arith.constant 0 : index
      %20 = vector.load %arg1[%c32, %c0_24] : memref<224x16xf32, #tpu.memory_space<vmem>>, vector<32x16xf32>
      %cst_25 = arith.constant dense<0.000000e+00> : vector<2x16xf32>
      %21 = tpu.matmul %19, %20, %cst_25 {dimension_numbers = #tpu.dot_dimension_numbers<[1], [0], [0], [1], [0, 0, 1, 1], [], []>} : vector<2x32xf32>, vector<32x16xf32>, vector<2x16xf32> -> vector<2x16xf32>
      %22 = arith.addf %18, %21 : vector<2x16xf32>
      %c136 = arith.constant 136 : index
      %c0_26 = arith.constant 0 : index
      %23 = vector.load %arg1[%c136, %c0_26] : memref<224x16xf32, #tpu.memory_space<vmem>>, vector<1x16xf32>
      %24 = vector.broadcast %23 : vector<1x16xf32> to vector<2x16xf32>
      %25 = arith.addf %22, %24 : vector<2x16xf32>
      %c144 = arith.constant 144 : index
      %c0_27 = arith.constant 0 : index
      %26 = vector.load %arg1[%c144, %c0_27] : memref<224x16xf32, #tpu.memory_space<vmem>>, vector<1x16xf32>
      %c152 = arith.constant 152 : index
      %c0_28 = arith.constant 0 : index
      %27 = vector.load %arg1[%c152, %c0_28] : memref<224x16xf32, #tpu.memory_space<vmem>>, vector<1x16xf32>
      %cst_29 = arith.constant dense<0.000000e+00> : vector<16xf32>
      %28 = vector.multi_reduction <add>, %25, %cst_29 [0] : vector<2x16xf32> to vector<16xf32>
      %29 = vector.shape_cast %28 : vector<16xf32> to vector<1x16xf32>
      %cst_30 = arith.constant 2.000000e+00 : f32
      %30 = vector.broadcast %cst_30 : f32 to vector<1x16xf32>
      %31 = arith.divf %29, %30 : vector<1x16xf32>
      %32 = vector.broadcast %31 : vector<1x16xf32> to vector<2x16xf32>
      %33 = arith.subf %25, %32 : vector<2x16xf32>
      %34 = arith.mulf %33, %33 : vector<2x16xf32>
      %cst_31 = arith.constant dense<0.000000e+00> : vector<16xf32>
      %35 = vector.multi_reduction <add>, %34, %cst_31 [0] : vector<2x16xf32> to vector<16xf32>
      %36 = vector.shape_cast %35 : vector<16xf32> to vector<1x16xf32>
      %cst_32 = arith.constant 2.000000e+00 : f32
      %37 = vector.broadcast %cst_32 : f32 to vector<1x16xf32>
      %38 = arith.divf %36, %37 : vector<1x16xf32>
      %39 = vector.broadcast %31 : vector<1x16xf32> to vector<2x16xf32>
      %40 = arith.subf %25, %39 : vector<2x16xf32>
      %cst_33 = arith.constant 9.99999974E-6 : f32
      %41 = vector.broadcast %cst_33 : f32 to vector<1x16xf32>
      %42 = arith.addf %38, %41 : vector<1x16xf32>
      %43 = math.rsqrt %42 : vector<1x16xf32>
      %44 = vector.broadcast %43 : vector<1x16xf32> to vector<2x16xf32>
      %45 = arith.mulf %40, %44 : vector<2x16xf32>
      %46 = vector.broadcast %26 : vector<1x16xf32> to vector<2x16xf32>
      %47 = arith.mulf %45, %46 : vector<2x16xf32>
      %48 = vector.broadcast %27 : vector<1x16xf32> to vector<2x16xf32>
      %49 = arith.addf %47, %48 : vector<2x16xf32>
      %cst_34 = arith.constant 0.000000e+00 : f32
      %50 = vector.broadcast %cst_34 : f32 to vector<2x16xf32>
      %51 = arith.maximumf %49, %50 : vector<2x16xf32>
      %c64 = arith.constant 64 : index
      %c0_35 = arith.constant 0 : index
      %52 = vector.load %arg1[%c64, %c0_35] : memref<224x16xf32, #tpu.memory_space<vmem>>, vector<16x8xf32>
      %cst_36 = arith.constant dense<0.000000e+00> : vector<2x8xf32>
      %53 = tpu.matmul %51, %52, %cst_36 {dimension_numbers = #tpu.dot_dimension_numbers<[1], [0], [0], [1], [0, 0, 1, 1], [], []>} : vector<2x16xf32>, vector<16x8xf32>, vector<2x8xf32> -> vector<2x8xf32>
      %c160 = arith.constant 160 : index
      %c0_37 = arith.constant 0 : index
      %54 = vector.load %arg1[%c160, %c0_37] : memref<224x16xf32, #tpu.memory_space<vmem>>, vector<1x8xf32>
      %55 = vector.broadcast %54 : vector<1x8xf32> to vector<2x8xf32>
      %56 = arith.addf %53, %55 : vector<2x8xf32>
      %c168 = arith.constant 168 : index
      %c0_38 = arith.constant 0 : index
      %57 = vector.load %arg1[%c168, %c0_38] : memref<224x16xf32, #tpu.memory_space<vmem>>, vector<1x8xf32>
      %c176 = arith.constant 176 : index
      %c0_39 = arith.constant 0 : index
      %58 = vector.load %arg1[%c176, %c0_39] : memref<224x16xf32, #tpu.memory_space<vmem>>, vector<1x8xf32>
      %cst_40 = arith.constant dense<0.000000e+00> : vector<8xf32>
      %59 = vector.multi_reduction <add>, %56, %cst_40 [0] : vector<2x8xf32> to vector<8xf32>
      %60 = vector.shape_cast %59 : vector<8xf32> to vector<1x8xf32>
      %cst_41 = arith.constant 2.000000e+00 : f32
      %61 = vector.broadcast %cst_41 : f32 to vector<1x8xf32>
      %62 = arith.divf %60, %61 : vector<1x8xf32>
      %63 = vector.broadcast %62 : vector<1x8xf32> to vector<2x8xf32>
      %64 = arith.subf %56, %63 : vector<2x8xf32>
      %65 = arith.mulf %64, %64 : vector<2x8xf32>
      %cst_42 = arith.constant dense<0.000000e+00> : vector<8xf32>
      %66 = vector.multi_reduction <add>, %65, %cst_42 [0] : vector<2x8xf32> to vector<8xf32>
      %67 = vector.shape_cast %66 : vector<8xf32> to vector<1x8xf32>
      %cst_43 = arith.constant 2.000000e+00 : f32
      %68 = vector.broadcast %cst_43 : f32 to vector<1x8xf32>
      %69 = arith.divf %67, %68 : vector<1x8xf32>
      %70 = vector.broadcast %62 : vector<1x8xf32> to vector<2x8xf32>
      %71 = arith.subf %56, %70 : vector<2x8xf32>
      %cst_44 = arith.constant 9.99999974E-6 : f32
      %72 = vector.broadcast %cst_44 : f32 to vector<1x8xf32>
      %73 = arith.addf %69, %72 : vector<1x8xf32>
      %74 = math.rsqrt %73 : vector<1x8xf32>
      %75 = vector.broadcast %74 : vector<1x8xf32> to vector<2x8xf32>
      %76 = arith.mulf %71, %75 : vector<2x8xf32>
      %77 = vector.broadcast %57 : vector<1x8xf32> to vector<2x8xf32>
      %78 = arith.mulf %76, %77 : vector<2x8xf32>
      %79 = vector.broadcast %58 : vector<1x8xf32> to vector<2x8xf32>
      %80 = arith.addf %78, %79 : vector<2x8xf32>
      %cst_45 = arith.constant 0.000000e+00 : f32
      %81 = vector.broadcast %cst_45 : f32 to vector<2x8xf32>
      %82 = arith.maximumf %80, %81 : vector<2x8xf32>
      %c80 = arith.constant 80 : index
      %c0_46 = arith.constant 0 : index
      %83 = vector.load %arg1[%c80, %c0_46] : memref<224x16xf32, #tpu.memory_space<vmem>>, vector<8x4xf32>
      %cst_47 = arith.constant dense<0.000000e+00> : vector<2x4xf32>
      %84 = tpu.matmul %82, %83, %cst_47 {dimension_numbers = #tpu.dot_dimension_numbers<[1], [0], [0], [1], [0, 0, 1, 1], [], []>} : vector<2x8xf32>, vector<8x4xf32>, vector<2x4xf32> -> vector<2x4xf32>
      %c184 = arith.constant 184 : index
      %c0_48 = arith.constant 0 : index
      %85 = vector.load %arg1[%c184, %c0_48] : memref<224x16xf32, #tpu.memory_space<vmem>>, vector<1x4xf32>
      %86 = vector.broadcast %85 : vector<1x4xf32> to vector<2x4xf32>
      %87 = arith.addf %84, %86 : vector<2x4xf32>
      %c192 = arith.constant 192 : index
      %c0_49 = arith.constant 0 : index
      %88 = vector.load %arg1[%c192, %c0_49] : memref<224x16xf32, #tpu.memory_space<vmem>>, vector<1x4xf32>
      %c200 = arith.constant 200 : index
      %c0_50 = arith.constant 0 : index
      %89 = vector.load %arg1[%c200, %c0_50] : memref<224x16xf32, #tpu.memory_space<vmem>>, vector<1x4xf32>
      %cst_51 = arith.constant dense<0.000000e+00> : vector<4xf32>
      %90 = vector.multi_reduction <add>, %87, %cst_51 [0] : vector<2x4xf32> to vector<4xf32>
      %91 = vector.shape_cast %90 : vector<4xf32> to vector<1x4xf32>
      %cst_52 = arith.constant 2.000000e+00 : f32
      %92 = vector.broadcast %cst_52 : f32 to vector<1x4xf32>
      %93 = arith.divf %91, %92 : vector<1x4xf32>
      %94 = vector.broadcast %93 : vector<1x4xf32> to vector<2x4xf32>
      %95 = arith.subf %87, %94 : vector<2x4xf32>
      %96 = arith.mulf %95, %95 : vector<2x4xf32>
      %cst_53 = arith.constant dense<0.000000e+00> : vector<4xf32>
      %97 = vector.multi_reduction <add>, %96, %cst_53 [0] : vector<2x4xf32> to vector<4xf32>
      %98 = vector.shape_cast %97 : vector<4xf32> to vector<1x4xf32>
      %cst_54 = arith.constant 2.000000e+00 : f32
      %99 = vector.broadcast %cst_54 : f32 to vector<1x4xf32>
      %100 = arith.divf %98, %99 : vector<1x4xf32>
      %101 = vector.broadcast %93 : vector<1x4xf32> to vector<2x4xf32>
      %102 = arith.subf %87, %101 : vector<2x4xf32>
      %cst_55 = arith.constant 9.99999974E-6 : f32
      %103 = vector.broadcast %cst_55 : f32 to vector<1x4xf32>
      %104 = arith.addf %100, %103 : vector<1x4xf32>
      %105 = math.rsqrt %104 : vector<1x4xf32>
      %106 = vector.broadcast %105 : vector<1x4xf32> to vector<2x4xf32>
      %107 = arith.mulf %102, %106 : vector<2x4xf32>
      %108 = vector.broadcast %88 : vector<1x4xf32> to vector<2x4xf32>
      %109 = arith.mulf %107, %108 : vector<2x4xf32>
      %110 = vector.broadcast %89 : vector<1x4xf32> to vector<2x4xf32>
      %111 = arith.addf %109, %110 : vector<2x4xf32>
      %cst_56 = arith.constant 0.000000e+00 : f32
      %112 = vector.broadcast %cst_56 : f32 to vector<2x4xf32>
      %113 = arith.maximumf %111, %112 : vector<2x4xf32>
      %c88 = arith.constant 88 : index
      %c0_57 = arith.constant 0 : index
      %114 = vector.load %arg1[%c88, %c0_57] : memref<224x16xf32, #tpu.memory_space<vmem>>, vector<4x4xf32>
      %cst_58 = arith.constant dense<0.000000e+00> : vector<2x4xf32>
      %115 = tpu.matmul %113, %114, %cst_58 {dimension_numbers = #tpu.dot_dimension_numbers<[1], [0], [0], [1], [0, 0, 1, 1], [], []>} : vector<2x4xf32>, vector<4x4xf32>, vector<2x4xf32> -> vector<2x4xf32>
      %c208 = arith.constant 208 : index
      %c0_59 = arith.constant 0 : index
      %116 = vector.load %arg1[%c208, %c0_59] : memref<224x16xf32, #tpu.memory_space<vmem>>, vector<1x4xf32>
      %117 = vector.broadcast %116 : vector<1x4xf32> to vector<2x4xf32>
      %118 = arith.addf %115, %117 : vector<2x4xf32>
      %c104 = arith.constant 104 : index
      %c0_60 = arith.constant 0 : index
      %119 = vector.load %arg1[%c104, %c0_60] : memref<224x16xf32, #tpu.memory_space<vmem>>, vector<4x16xf32>
      %cst_61 = arith.constant dense<0.000000e+00> : vector<2x16xf32>
      %120 = tpu.matmul %118, %119, %cst_61 {dimension_numbers = #tpu.dot_dimension_numbers<[1], [0], [0], [1], [0, 0, 1, 1], [], []>} : vector<2x4xf32>, vector<4x16xf32>, vector<2x16xf32> -> vector<2x16xf32>
      %c112 = arith.constant 112 : index
      %c0_62 = arith.constant 0 : index
      %121 = vector.load %arg1[%c112, %c0_62] : memref<224x16xf32, #tpu.memory_space<vmem>>, vector<4x16xf32>
      %cst_63 = arith.constant dense<0.000000e+00> : vector<2x16xf32>
      %122 = tpu.matmul %118, %121, %cst_63 {dimension_numbers = #tpu.dot_dimension_numbers<[1], [0], [0], [1], [0, 0, 1, 1], [], []>} : vector<2x4xf32>, vector<4x16xf32>, vector<2x16xf32> -> vector<2x16xf32>
      %123 = arith.mulf %120, %122 : vector<2x16xf32>
      %124 = arith.mulf %118, %118 : vector<2x4xf32>
      %cst_64 = arith.constant dense<0.000000e+00> : vector<2xf32>
      %125 = vector.multi_reduction <add>, %124, %cst_64 [1] : vector<2x4xf32> to vector<2xf32>
      %126 = vector.shape_cast %125 : vector<2xf32> to vector<2x1xf32>
      %c120 = arith.constant 120 : index
      %c0_65 = arith.constant 0 : index
      %127 = vector.load %arg1[%c120, %c0_65] : memref<224x16xf32, #tpu.memory_space<vmem>>, vector<16x16xf32>
      %cst_66 = arith.constant dense<0.000000e+00> : vector<2x16xf32>
      %128 = tpu.matmul %123, %127, %cst_66 {dimension_numbers = #tpu.dot_dimension_numbers<[1], [0], [0], [1], [0, 0, 1, 1], [], []>} : vector<2x16xf32>, vector<16x16xf32>, vector<2x16xf32> -> vector<2x16xf32>
      %129 = vector.broadcast %126 : vector<2x1xf32> to vector<2x16xf32>
      %130 = arith.divf %128, %129 : vector<2x16xf32>
      %c96 = arith.constant 96 : index
      %c0_67 = arith.constant 0 : index
      %131 = vector.load %arg1[%c96, %c0_67] : memref<224x16xf32, #tpu.memory_space<vmem>>, vector<4x16xf32>
      %cst_68 = arith.constant dense<0.000000e+00> : vector<2x16xf32>
      %132 = tpu.matmul %113, %131, %cst_68 {dimension_numbers = #tpu.dot_dimension_numbers<[1], [0], [0], [1], [0, 0, 1, 1], [], []>} : vector<2x4xf32>, vector<4x16xf32>, vector<2x16xf32> -> vector<2x16xf32>
      %c216 = arith.constant 216 : index
      %c0_69 = arith.constant 0 : index
      %133 = vector.load %arg1[%c216, %c0_69] : memref<224x16xf32, #tpu.memory_space<vmem>>, vector<1x16xf32>
      %134 = vector.broadcast %133 : vector<1x16xf32> to vector<2x16xf32>
      %135 = arith.addf %132, %134 : vector<2x16xf32>
      %136 = arith.addf %130, %135 : vector<2x16xf32>
      %c0_70 = arith.constant 0 : index
      %c0_71 = arith.constant 0 : index
      %137 = vector.load %arg4[%c0_70, %c0_71] : memref<2x16xf32, #tpu.memory_space<vmem>>, vector<2x16xf32>
      tpu.vector_store %arg4[%c0_70, %c0_71], %136 {strides = array<i32>} : memref<2x16xf32, #tpu.memory_space<vmem>>, vector<2x16xf32>,
    } else {
    }
    return
  }
  func.func @transform_0(%arg0: i32) -> (i32, i32) {
    %c0_i32 = arith.constant 0 : i32
    %c0_i32_0 = arith.constant 0 : i32
    %c0_i32_1 = arith.constant 0 : i32
    return %c0_i32, %c0_i32_0 : i32, i32
  }
  func.func @transform_1(%arg0: i32) -> (i32, i32, i32) {
    %c0_i32 = arith.constant 0 : i32
    %c0_i32_0 = arith.constant 0 : i32
    %c0_i32_1 = arith.constant 0 : i32
    return %c0_i32, %arg0, %c0_i32_0 : i32, i32, i32
  }
  func.func @transform_2(%arg0: i32) -> (i32, i32, i32) {
    %c0_i32 = arith.constant 0 : i32
    %c0_i32_0 = arith.constant 0 : i32
    %c0_i32_1 = arith.constant 0 : i32
    return %c0_i32, %arg0, %c0_i32_0 : i32, i32, i32
  }
  func.func @transform_3(%arg0: i32) -> (i32, i32) {
    %c0_i32 = arith.constant 0 : i32
    %c0_i32_0 = arith.constant 0 : i32
    %c0_i32_1 = arith.constant 0 : i32
    return %c0_i32, %c0_i32_0 : i32, i32
  }
}

</mosaic_0001>

<llo_original>
// kernel: tpu_custom_call.1
$region0: #{tpu_custom_call.1}
  #allocation0 [shape = 'u32[]', space=smem, size = 0x4, offset = 0x4, fixed_abs, tag = 'smem constant byte address 0x4 - core index']
  #allocation1 [shape = 'u32[144,128]{1,0:T(1,128)}', space=vmem, size = 0x12000, scoped, tag = 'internal scratch']
  #allocation2 [shape = 'f32[2,32]{1,0:T(2,128)}', space=vmem, size = 0x400, scoped, tag = 'scratch operand']
  #allocation3 [shape = 'f32[2,32]{1,0:T(2,128)}', space=vmem, size = 0x400, scoped, tag = 'scratch operand']
  %s0 = inlined_call_operand.vmem [shape: f32[224,16], index: 0, kind: input, shape index: {}]
  %s1 = inlined_call_operand.vmem [shape: f32[2,16,32], index: 1, kind: input, shape index: {}]
  %s2 = inlined_call_operand.vmem [shape: f32[2,16,32], index: 2, kind: input, shape index: {}]
  %s3 = inlined_call_operand.hbm [shape: f32[2,16], index: 3, kind: output, shape index: {}]
  %s4 = sld [smem:[#allocation0]]
  $region30: #{tpu_custom_call.1} parent=0
    _
  %s6 = ssub.s32 1, %s4
  %s7 = scalar_select 0, %s6, %s4
  $region1: #{tpu_custom_call.1} parent=0
    #allocation4 [shape = 'u8[1024]{0}', space=vmem, size = 0x400, scoped, tag = 'output window, operand 0, single buffered']
    #allocation5 [shape = 's32[1]{0}', space=sflag, size = 0x4, scoped, tag = 'scoped memory for tpu_custom_call.1']
    %8 = vsyncpa [#allocation5], 0
    // Predicated region
    $region2: #{tpu_custom_call.1} parent=1 // pred_check
      _
    $region3: #{tpu_custom_call.1} parent=1 // pred_check_branch
      %10 = sbr.rel (0) target = $region5
    $region4: #{tpu_custom_call.1} parent=1 // pred_region
      _
    $region5: #{tpu_custom_call.1} parent=1 // pred_fallthru
      _
    // Predicated region
    $region6: #{tpu_custom_call.1} parent=1 // pred_check
      _
    $region7: #{tpu_custom_call.1} parent=1 // pred_check_branch
      %12 = sbr.rel (0) target = $region9
    $region8: #{tpu_custom_call.1} parent=1 // pred_region
      _
    $region9: #{tpu_custom_call.1} parent=1 // pred_fallthru
      _
    // Predicated region
    $region10: #{tpu_custom_call.1} parent=1 // pred_check
      _
    $region11: #{tpu_custom_call.1} parent=1 // pred_check_branch
      %14 = sbr.rel (0) target = $region13
    $region12: #{tpu_custom_call.1} parent=1 // pred_region
      _
    $region13: #{tpu_custom_call.1} parent=1 // pred_fallthru
      _
    %p15 = scmp.eq.s32.totalorder 0, 0
    // Predicated region
    $region14: #{tpu_custom_call.1} parent=1 // pred_check
      %p16 = pneg %p15
    $region15: #{tpu_custom_call.1} parent=1 // pred_check_branch
      %18 = sbr.rel (%p16) target = $region17
    $region16: #{tpu_custom_call.1} parent=1 // pred_region
      %vm19 = vcmask 254976
      %20 = vst.msk [vmem:[#allocation2] sm:$0x3] %vm19, -inf
      %21 = vst.msk [vmem:[#allocation3] sm:$0x3] %vm19, -inf
    $region17: #{tpu_custom_call.1} parent=1 // pred_fallthru
      _
    %v22 = vld [vmem:[#allocation2] sm:$0x3]
    %v23 = vld [vmem:[%s1] sm:$0xff]
    %v24 = vld [vmem:[%s1 + $0x8] sm:$0xff]
    %v25 = vld [vmem:[%s1 + $0x10] sm:$0xff]
    %v26 = vld [vmem:[%s1 + $0x18] sm:$0xff]
    %vm27 = vcmask 261120
    %v28 = vsel %vm27, %v23, -inf
    %v29 = vsel %vm27, %v24, -inf
    %v30 = vmax.f32 %v28, %v29
    %v31 = vrot.slane %v30, 4
    %v32 = vmax.f32 %v30, %v31
    %v33 = vrot.slane %v32, 2
    %v34 = vmax.f32 %v32, %v33
    %v35 = vrot.slane %v34, 1
    %v36 = vmax.f32 %v34, %v35
    %v37 = vsel %vm27, %v25, -inf
    %v38 = vsel %vm27, %v26, -inf
    %v39 = vmax.f32 %v37, %v38
    %v40 = vrot.slane %v39, 4
    %v41 = vmax.f32 %v39, %v40
    %v42 = vrot.slane %v41, 2
    %v43 = vmax.f32 %v41, %v42
    %v44 = vrot.slane %v43, 1
    %v45 = vmax.f32 %v43, %v44
    %vm48 = vcmask 1041409
    %v49 = vsel %vm48, %v45, %v36
    %v51 = vmax.f32 %v22, %v49
    %vm52 = vcmask 254976
    %53 = vst.msk [vmem:[#allocation2] sm:$0x3] %vm52, %v51
    %v54 = vld [vmem:[#allocation3] sm:$0x3]
    %v55 = vld [vmem:[%s2] sm:$0xff]
    %v56 = vld [vmem:[%s2 + $0x8] sm:$0xff]
    %v57 = vld [vmem:[%s2 + $0x10] sm:$0xff]
    %v58 = vld [vmem:[%s2 + $0x18] sm:$0xff]
    %v59 = vsel %vm27, %v55, -inf
    %v60 = vsel %vm27, %v56, -inf
    %v61 = vmax.f32 %v59, %v60
    %v62 = vrot.slane %v61, 4
    %v63 = vmax.f32 %v61, %v62
    %v64 = vrot.slane %v63, 2
    %v65 = vmax.f32 %v63, %v64
    %v66 = vrot.slane %v65, 1
    %v67 = vmax.f32 %v65, %v66
    %v68 = vsel %vm27, %v57, -inf
    %v69 = vsel %vm27, %v58, -inf
    %v70 = vmax.f32 %v68, %v69
    %v71 = vrot.slane %v70, 4
    %v72 = vmax.f32 %v70, %v71
    %v73 = vrot.slane %v72, 2
    %v74 = vmax.f32 %v72, %v73
    %v75 = vrot.slane %v74, 1
    %v76 = vmax.f32 %v74, %v75
    %v79 = vsel %vm48, %v76, %v67
    %v81 = vmax.f32 %v54, %v79
    %82 = vst.msk [vmem:[#allocation3] sm:$0x3] %vm52, %v81
    // Predicated region
    $region18: #{tpu_custom_call.1} parent=1 // pred_check
      %p83 = pneg %p15
    $region19: #{tpu_custom_call.1} parent=1 // pred_check_branch
      %85 = sbr.rel (%p83) target = $region21
    $region20: #{tpu_custom_call.1} parent=1 // pred_region
      %v86 = vld [vmem:[#allocation2] sm:$0x3]
      %v87 = vld [vmem:[%s0] sm:$0xff]
      %v88 = vld [vmem:[%s0 + $0x8] sm:$0xff]
      %v89 = vld [vmem:[%s0 + $0x10] sm:$0xff]
      %v90 = vld [vmem:[%s0 + $0x18] sm:$0xff]
      %v91 = vld [vmem:[#allocation3] sm:$0x3]
      %v92 = vld [vmem:[%s0 + $0x20] sm:$0xff]
      %v93 = vld [vmem:[%s0 + $0x28] sm:$0xff]
      %v94 = vld [vmem:[%s0 + $0x30] sm:$0xff]
      %v95 = vld [vmem:[%s0 + $0x38] sm:$0xff]
      %v97 = vsel %vm27, %v91, 0
      %99 = vmatprep.subr.mxu0 0.0
      %100 = vmatpush1.msra.mxu0 %v92
      %101 = vmatprep.subr.mxu0 0.0
      %102 = vmatpush1.msra.mxu0 %v93
      %103 = vmatprep.subr.mxu0 0.0
      %104 = vmatpush1.msra.mxu0 %v94
      %105 = vmatprep.subr.mxu0 0.0
      %106 = vmatpush1.msra.mxu0 %v95
      %107 = vmatprep.subr.mxu0 0.0
      %108 = vmatpush1.msra.mxu0 0.0
      %109 = vmatprep.subr.mxu0 0.0
      %110 = vmatpush1.msra.mxu0 0.0
      %111 = vmatprep.subr.mxu0 0.0
      %112 = vmatpush1.msra.mxu0 0.0
      %113 = vmatprep.subr.mxu0 0.0
      %114 = vmatpush1.msra.mxu0 0.0
      %115 = vmatprep.subr.mxu0 0.0
      %116 = vmatpush1.msra.mxu0 0.0
      %117 = vmatprep.subr.mxu0 0.0
      %118 = vmatpush1.msra.mxu0 0.0
      %119 = vmatprep.subr.mxu0 0.0
      %120 = vmatpush1.msra.mxu0 0.0
      %121 = vmatprep.subr.mxu0 0.0
      %122 = vmatpush1.msra.mxu0 0.0
      %123 = vmatprep.subr.mxu0 0.0
      %124 = vmatpush1.msra.mxu0 0.0
      %125 = vmatprep.subr.mxu0 0.0
      %126 = vmatpush1.msra.mxu0 0.0
      %127 = vmatprep.subr.mxu0 0.0
      %128 = vmatpush1.msra.mxu0 0.0
      %129 = vmatprep.subr.mxu0 0.0
      %130 = vmatpush1.msra.mxu0 0.0
      %131 = vmatprep.subr.mxu0 0.0
      %132 = vmatpush1.msra.mxu0 0.0
      %133 = vmatprep.subr.mxu0 0.0
      %134 = vmatpush1.msra.mxu0 0.0
      %135 = vmatprep.subr.mxu0 0.0
      %136 = vmatpush1.msra.mxu0 0.0
      %137 = vmatprep.subr.mxu0 0.0
      %138 = vmatpush1.msra.mxu0 0.0
      %139 = vmatprep.subr.mxu0 0.0
      %140 = vmatpush1.msra.mxu0 0.0
      %141 = vmatprep.subr.mxu0 0.0
      %142 = vmatpush1.msra.mxu0 0.0
      %143 = vmatprep.subr.mxu0 0.0
      %144 = vmatpush1.msra.mxu0 0.0
      %145 = vmatprep.subr.mxu0 0.0
      %146 = vmatpush1.msra.mxu0 0.0
      %147 = vmatprep.subr.mxu0 0.0
      %148 = vmatpush1.msra.mxu0 0.0
      %149 = vmatprep.subr.mxu0 0.0
      %150 = vmatpush1.msra.mxu0 0.0
      %151 = vmatprep.subr.mxu0 0.0
      %152 = vmatpush1.msra.mxu0 0.0
      %153 = vmatprep.subr.mxu0 0.0
      %154 = vmatpush1.msra.mxu0 0.0
      %155 = vmatprep.subr.mxu0 0.0
      %156 = vmatpush1.msra.mxu0 0.0
      %157 = vmatprep.subr.mxu0 0.0
      %158 = vmatpush1.msra.mxu0 0.0
      %159 = vmatprep.subr.mxu0 0.0
      %160 = vmatpush1.msra.mxu0 0.0
      %161 = vmatprep.subr.mxu0 0.0
      %162 = vmatpush1.msra.mxu0 0.0
      %163 = vmatprep.mubr.f32.mxu0 0.0
      %164 = vmatmul.mubr.f32.gmra.mrb[0].mxu0 %v97
      %v165 = vpop.f32.mrb[0].mxu0
      %v166 = vadd.f32 0.0, %v165
      %v167 = vpop.f32.mrb[0].mxu0
      %168 = vdwg.mxu0
      %v170 = vsel %vm27, %v86, 0
      %172 = vmatprep.subr.mxu0 0.0
      %173 = vmatpush1.msra.mxu0 %v87
      %174 = vmatprep.subr.mxu0 0.0
      %175 = vmatpush1.msra.mxu0 %v88
      %176 = vmatprep.subr.mxu0 0.0
      %177 = vmatpush1.msra.mxu0 %v89
      %178 = vmatprep.subr.mxu0 0.0
      %179 = vmatpush1.msra.mxu0 %v90
      %180 = vmatprep.subr.mxu0 0.0
      %181 = vmatpush1.msra.mxu0 0.0
      %182 = vmatprep.subr.mxu0 0.0
      %183 = vmatpush1.msra.mxu0 0.0
      %184 = vmatprep.subr.mxu0 0.0
      %185 = vmatpush1.msra.mxu0 0.0
      %186 = vmatprep.subr.mxu0 0.0
      %187 = vmatpush1.msra.mxu0 0.0
      %188 = vmatprep.subr.mxu0 0.0
      %189 = vmatpush1.msra.mxu0 0.0
      %190 = vmatprep.subr.mxu0 0.0
      %191 = vmatpush1.msra.mxu0 0.0
      %192 = vmatprep.subr.mxu0 0.0
      %193 = vmatpush1.msra.mxu0 0.0
      %194 = vmatprep.subr.mxu0 0.0
      %195 = vmatpush1.msra.mxu0 0.0
      %196 = vmatprep.subr.mxu0 0.0
      %197 = vmatpush1.msra.mxu0 0.0
      %198 = vmatprep.subr.mxu0 0.0
      %199 = vmatpush1.msra.mxu0 0.0
      %200 = vmatprep.subr.mxu0 0.0
      %201 = vmatpush1.msra.mxu0 0.0
      %202 = vmatprep.subr.mxu0 0.0
      %203 = vmatpush1.msra.mxu0 0.0
      %204 = vmatprep.subr.mxu0 0.0
      %205 = vmatpush1.msra.mxu0 0.0
      %206 = vmatprep.subr.mxu0 0.0
      %207 = vmatpush1.msra.mxu0 0.0
      %208 = vmatprep.subr.mxu0 0.0
      %209 = vmatpush1.msra.mxu0 0.0
      %210 = vmatprep.subr.mxu0 0.0
      %211 = vmatpush1.msra.mxu0 0.0
      %212 = vmatprep.subr.mxu0 0.0
      %213 = vmatpush1.msra.mxu0 0.0
      %214 = vmatprep.subr.mxu0 0.0
      %215 = vmatpush1.msra.mxu0 0.0
      %216 = vmatprep.subr.mxu0 0.0
      %217 = vmatpush1.msra.mxu0 0.0
      %218 = vmatprep.subr.mxu0 0.0
      %219 = vmatpush1.msra.mxu0 0.0
      %220 = vmatprep.subr.mxu0 0.0
      %221 = vmatpush1.msra.mxu0 0.0
      %222 = vmatprep.subr.mxu0 0.0
      %223 = vmatpush1.msra.mxu0 0.0
      %224 = vmatprep.subr.mxu0 0.0
      %225 = vmatpush1.msra.mxu0 0.0
      %226 = vmatprep.subr.mxu0 0.0
      %227 = vmatpush1.msra.mxu0 0.0
      %228 = vmatprep.subr.mxu0 0.0
      %229 = vmatpush1.msra.mxu0 0.0
      %230 = vmatprep.subr.mxu0 0.0
      %231 = vmatpush1.msra.mxu0 0.0
      %232 = vmatprep.subr.mxu0 0.0
      %233 = vmatpush1.msra.mxu0 0.0
      %234 = vmatprep.subr.mxu0 0.0
      %235 = vmatpush1.msra.mxu0 0.0
      %236 = vmatprep.mubr.f32.mxu0 0.0
      %237 = vmatmul.mubr.f32.gmra.mrb[0].mxu0 %v170
      %v238 = vpop.f32.mrb[0].mxu0
      %v239 = vadd.f32 %v166, %v238
      %v240 = vpop.f32.mrb[0].mxu0
      %241 = vdwg.mxu0
      %v242 = vld [vmem:[%s0 + $0x88] sm:$0x1]
      %v243 = vlaneseq
      %v244 = vshrl.u32 %v243, 7
      %v245 = vsub.s32 0, %v244
      %v246 = vrot.slane %v242, %v245
      %v247 = vadd.f32 %v239, %v246
      %v248 = vld [vmem:[%s0 + $0x90] sm:$0x1]
      %v249 = vld [vmem:[%s0 + $0x98] sm:$0x1]
      %vm250 = vcmask 123904
      %v251 = vsel %vm250, %v247, 0.0
      %v252 = vrot.slane %v251, 4
      %v253 = vadd.f32 %v251, %v252
      %v254 = vrot.slane %v253, 2
      %v255 = vadd.f32 %v253, %v254
      %v256 = vrot.slane %v255, 1
      %v257 = vadd.f32 %v255, %v256
      %v258 = vrcp.pop 2.0
      %v259 = vmul.f32 %v257, %v258
      %v260 = vsub.f32 %v247, %v259
      %v261 = vmul.f32 %v260, %v260
      %v262 = vsel %vm250, %v261, 0.0
      %v263 = vrot.slane %v262, 4
      %v264 = vadd.f32 %v262, %v263
      %v265 = vrot.slane %v264, 2
      %v266 = vadd.f32 %v264, %v265
      %v267 = vrot.slane %v266, 1
      %v268 = vadd.f32 %v266, %v267
      %v269 = vmul.f32 %v268, %v258
      %v270 = vadd.f32 %v269, 1e-05
      %v271 = vrsqrt.pop %v270
      %v272 = vmul.f32 %v260, %v271
      %v273 = vlaneseq
      %v274 = vshrl.u32 %v273, 7
      %v275 = vsub.s32 0, %v274
      %v276 = vrot.slane %v248, %v275
      %v277 = vmul.f32 %v272, %v276
      %v278 = vlaneseq
      %v279 = vshrl.u32 %v278, 7
      %v280 = vsub.s32 0, %v279
      %v281 = vrot.slane %v249, %v280
      %v282 = vadd.f32 %v277, %v281
      %v283 = vmax.f32 %v282, 0.0
      %v284 = vld [vmem:[%s0 + $0x40] sm:$0xff]
      %v285 = vld [vmem:[%s0 + $0x48] sm:$0xff]
      %v286 = vld [vmem:[%s0 + $0xa0] sm:$0x1]
      %v287 = vlaneseq
      %v288 = vshrl.u32 %v287, 7
      %v289 = vsub.s32 0, %v288
      %v290 = vrot.slane %v286, %v289
      %vm291 = vcmask 130048
      %v293 = vsel %vm291, %v283, 0
      %295 = vmatprep.subr.mxu0 0.0
      %296 = vmatpush1.msra.mxu0 %v284
      %297 = vmatprep.subr.mxu0 0.0
      %298 = vmatpush1.msra.mxu0 %v285
      %299 = vmatprep.subr.mxu0 0.0
      %300 = vmatpush1.msra.mxu0 0.0
      %301 = vmatprep.subr.mxu0 0.0
      %302 = vmatpush1.msra.mxu0 0.0
      %303 = vmatprep.subr.mxu0 0.0
      %304 = vmatpush1.msra.mxu0 0.0
      %305 = vmatprep.subr.mxu0 0.0
      %306 = vmatpush1.msra.mxu0 0.0
      %307 = vmatprep.subr.mxu0 0.0
      %308 = vmatpush1.msra.mxu0 0.0
      %309 = vmatprep.subr.mxu0 0.0
      %310 = vmatpush1.msra.mxu0 0.0
      %311 = vmatprep.subr.mxu0 0.0
      %312 = vmatpush1.msra.mxu0 0.0
      %313 = vmatprep.subr.mxu0 0.0
      %314 = vmatpush1.msra.mxu0 0.0
      %315 = vmatprep.subr.mxu0 0.0
      %316 = vmatpush1.msra.mxu0 0.0
      %317 = vmatprep.subr.mxu0 0.0
      %318 = vmatpush1.msra.mxu0 0.0
      %319 = vmatprep.subr.mxu0 0.0
      %320 = vmatpush1.msra.mxu0 0.0
      %321 = vmatprep.subr.mxu0 0.0
      %322 = vmatpush1.msra.mxu0 0.0
      %323 = vmatprep.subr.mxu0 0.0
      %324 = vmatpush1.msra.mxu0 0.0
      %325 = vmatprep.subr.mxu0 0.0
      %326 = vmatpush1.msra.mxu0 0.0
      %327 = vmatprep.subr.mxu0 0.0
      %328 = vmatpush1.msra.mxu0 0.0
      %329 = vmatprep.subr.mxu0 0.0
      %330 = vmatpush1.msra.mxu0 0.0
      %331 = vmatprep.subr.mxu0 0.0
      %332 = vmatpush1.msra.mxu0 0.0
      %333 = vmatprep.subr.mxu0 0.0
      %334 = vmatpush1.msra.mxu0 0.0
      %335 = vmatprep.subr.mxu0 0.0
      %336 = vmatpush1.msra.mxu0 0.0
      %337 = vmatprep.subr.mxu0 0.0
      %338 = vmatpush1.msra.mxu0 0.0
      %339 = vmatprep.subr.mxu0 0.0
      %340 = vmatpush1.msra.mxu0 0.0
      %341 = vmatprep.subr.mxu0 0.0
      %342 = vmatpush1.msra.mxu0 0.0
      %343 = vmatprep.subr.mxu0 0.0
      %344 = vmatpush1.msra.mxu0 0.0
      %345 = vmatprep.subr.mxu0 0.0
      %346 = vmatpush1.msra.mxu0 0.0
      %347 = vmatprep.subr.mxu0 0.0
      %348 = vmatpush1.msra.mxu0 0.0
      %349 = vmatprep.subr.mxu0 0.0
      %350 = vmatpush1.msra.mxu0 0.0
      %351 = vmatprep.subr.mxu0 0.0
      %352 = vmatpush1.msra.mxu0 0.0
      %353 = vmatprep.subr.mxu0 0.0
      %354 = vmatpush1.msra.mxu0 0.0
      %355 = vmatprep.subr.mxu0 0.0
      %356 = vmatpush1.msra.mxu0 0.0
      %357 = vmatprep.subr.mxu0 0.0
      %358 = vmatpush1.msra.mxu0 0.0
      %359 = vmatprep.mubr.f32.mxu0 0.0
      %360 = vmatmul.mubr.f32.gmra.mrb[0].mxu0 %v293
      %v361 = vpop.f32.mrb[0].mxu0
      %v362 = vadd.f32 %v290, %v361
      %v363 = vpop.f32.mrb[0].mxu0
      %364 = vdwg.mxu0
      %v365 = vld [vmem:[%s0 + $0xa8] sm:$0x1]
      %v366 = vld [vmem:[%s0 + $0xb0] sm:$0x1]
      %vm367 = vcmask 58368
      %v368 = vsel %vm367, %v362, 0.0
      %v369 = vrot.slane %v368, 4
      %v370 = vadd.f32 %v368, %v369
      %v371 = vrot.slane %v370, 2
      %v372 = vadd.f32 %v370, %v371
      %v373 = vrot.slane %v372, 1
      %v374 = vadd.f32 %v372, %v373
      %v375 = vmul.f32 %v374, %v258
      %v376 = vsub.f32 %v362, %v375
      %v377 = vmul.f32 %v376, %v376
      %v378 = vsel %vm367, %v377, 0.0
      %v379 = vrot.slane %v378, 4
      %v380 = vadd.f32 %v378, %v379
      %v381 = vrot.slane %v380, 2
      %v382 = vadd.f32 %v380, %v381
      %v383 = vrot.slane %v382, 1
      %v384 = vadd.f32 %v382, %v383
      %v385 = vmul.f32 %v384, %v258
      %v386 = vadd.f32 %v385, 1e-05
      %v387 = vrsqrt.pop %v386
      %v388 = vmul.f32 %v376, %v387
      %v389 = vlaneseq
      %v390 = vshrl.u32 %v389, 7
      %v391 = vsub.s32 0, %v390
      %v392 = vrot.slane %v365, %v391
      %v393 = vmul.f32 %v388, %v392
      %v394 = vlaneseq
      %v395 = vshrl.u32 %v394, 7
      %v396 = vsub.s32 0, %v395
      %v397 = vrot.slane %v366, %v396
      %v398 = vadd.f32 %v393, %v397
      %v399 = vmax.f32 %v398, 0.0
      %v400 = vld [vmem:[%s0 + $0x50] sm:$0xff]
      %v401 = vld [vmem:[%s0 + $0xb8] sm:$0x1]
      %v402 = vlaneseq
      %v403 = vshrl.u32 %v402, 7
      %v404 = vsub.s32 0, %v403
      %v405 = vrot.slane %v401, %v404
      %vm406 = vcmask 64512
      %v408 = vsel %vm406, %v399, 0
      %410 = vmatprep.subr.mxu0 0.0
      %411 = vmatpush1.msra.mxu0 %v400
      %412 = vmatprep.subr.mxu0 0.0
      %413 = vmatpush1.msra.mxu0 0.0
      %414 = vmatprep.subr.mxu0 0.0
      %415 = vmatpush1.msra.mxu0 0.0
      %416 = vmatprep.subr.mxu0 0.0
      %417 = vmatpush1.msra.mxu0 0.0
      %418 = vmatprep.subr.mxu0 0.0
      %419 = vmatpush1.msra.mxu0 0.0
      %420 = vmatprep.subr.mxu0 0.0
      %421 = vmatpush1.msra.mxu0 0.0
      %422 = vmatprep.subr.mxu0 0.0
      %423 = vmatpush1.msra.mxu0 0.0
      %424 = vmatprep.subr.mxu0 0.0
      %425 = vmatpush1.msra.mxu0 0.0
      %426 = vmatprep.subr.mxu0 0.0
      %427 = vmatpush1.msra.mxu0 0.0
      %428 = vmatprep.subr.mxu0 0.0
      %429 = vmatpush1.msra.mxu0 0.0
      %430 = vmatprep.subr.mxu0 0.0
      %431 = vmatpush1.msra.mxu0 0.0
      %432 = vmatprep.subr.mxu0 0.0
      %433 = vmatpush1.msra.mxu0 0.0
      %434 = vmatprep.subr.mxu0 0.0
      %435 = vmatpush1.msra.mxu0 0.0
      %436 = vmatprep.subr.mxu0 0.0
      %437 = vmatpush1.msra.mxu0 0.0
      %438 = vmatprep.subr.mxu0 0.0
      %439 = vmatpush1.msra.mxu0 0.0
      %440 = vmatprep.subr.mxu0 0.0
      %441 = vmatpush1.msra.mxu0 0.0
      %442 = vmatprep.subr.mxu0 0.0
      %443 = vmatpush1.msra.mxu0 0.0
      %444 = vmatprep.subr.mxu0 0.0
      %445 = vmatpush1.msra.mxu0 0.0
      %446 = vmatprep.subr.mxu0 0.0
      %447 = vmatpush1.msra.mxu0 0.0
      %448 = vmatprep.subr.mxu0 0.0
      %449 = vmatpush1.msra.mxu0 0.0
      %450 = vmatprep.subr.mxu0 0.0
      %451 = vmatpush1.msra.mxu0 0.0
      %452 = vmatprep.subr.mxu0 0.0
      %453 = vmatpush1.msra.mxu0 0.0
      %454 = vmatprep.subr.mxu0 0.0
      %455 = vmatpush1.msra.mxu0 0.0
      %456 = vmatprep.subr.mxu0 0.0
      %457 = vmatpush1.msra.mxu0 0.0
      %458 = vmatprep.subr.mxu0 0.0
      %459 = vmatpush1.msra.mxu0 0.0
      %460 = vmatprep.subr.mxu0 0.0
      %461 = vmatpush1.msra.mxu0 0.0
      %462 = vmatprep.subr.mxu0 0.0
      %463 = vmatpush1.msra.mxu0 0.0
      %464 = vmatprep.subr.mxu0 0.0
      %465 = vmatpush1.msra.mxu0 0.0
      %466 = vmatprep.subr.mxu0 0.0
      %467 = vmatpush1.msra.mxu0 0.0
      %468 = vmatprep.subr.mxu0 0.0
      %469 = vmatpush1.msra.mxu0 0.0
      %470 = vmatprep.subr.mxu0 0.0
      %471 = vmatpush1.msra.mxu0 0.0
      %472 = vmatprep.subr.mxu0 0.0
      %473 = vmatpush1.msra.mxu0 0.0
      %474 = vmatprep.mubr.f32.mxu0 0.0
      %475 = vmatmul.mubr.f32.gmra.mrb[0].mxu0 %v408
      %v476 = vpop.f32.mrb[0].mxu0
      %v477 = vadd.f32 %v405, %v476
      %v478 = vpop.f32.mrb[0].mxu0
      %479 = vdwg.mxu0
      %v480 = vld [vmem:[%s0 + $0xc0] sm:$0x1]
      %v481 = vld [vmem:[%s0 + $0xc8] sm:$0x1]
      %vm482 = vcmask 25600
      %v483 = vsel %vm482, %v477, 0.0
      %v484 = vrot.slane %v483, 4
      %v485 = vadd.f32 %v483, %v484
      %v486 = vrot.slane %v485, 2
      %v487 = vadd.f32 %v485, %v486
      %v488 = vrot.slane %v487, 1
      %v489 = vadd.f32 %v487, %v488
      %v490 = vmul.f32 %v489, %v258
      %v491 = vsub.f32 %v477, %v490
      %v492 = vmul.f32 %v491, %v491
      %v493 = vsel %vm482, %v492, 0.0
      %v494 = vrot.slane %v493, 4
      %v495 = vadd.f32 %v493, %v494
      %v496 = vrot.slane %v495, 2
      %v497 = vadd.f32 %v495, %v496
      %v498 = vrot.slane %v497, 1
      %v499 = vadd.f32 %v497, %v498
      %v500 = vmul.f32 %v499, %v258
      %v501 = vadd.f32 %v500, 1e-05
      %v502 = vrsqrt.pop %v501
      %v503 = vmul.f32 %v491, %v502
      %v504 = vlaneseq
      %v505 = vshrl.u32 %v504, 7
      %v506 = vsub.s32 0, %v505
      %v507 = vrot.slane %v480, %v506
      %v508 = vmul.f32 %v503, %v507
      %v509 = vlaneseq
      %v510 = vshrl.u32 %v509, 7
      %v511 = vsub.s32 0, %v510
      %v512 = vrot.slane %v481, %v511
      %v513 = vadd.f32 %v508, %v512
      %v514 = vmax.f32 %v513, 0.0
      %v515 = vld [vmem:[%s0 + $0x58] sm:$0xf]
      %v516 = vld [vmem:[%s0 + $0xd0] sm:$0x1]
      %v517 = vlaneseq
      %v518 = vshrl.u32 %v517, 7
      %v519 = vsub.s32 0, %v518
      %v520 = vrot.slane %v516, %v519
      %vm521 = vcmask 31744
      %v523 = vsel %vm521, %v514, 0
      %vm525 = vcmask 1043456
      %v527 = vsel %vm525, %v515, 0
      %529 = vmatprep.subr.mxu0 0.0
      %530 = vmatpush1.msra.mxu0 %v527
      %531 = vmatprep.subr.mxu0 0.0
      %532 = vmatpush1.msra.mxu0 0.0
      %533 = vmatprep.subr.mxu0 0.0
      %534 = vmatpush1.msra.mxu0 0.0
      %535 = vmatprep.subr.mxu0 0.0
      %536 = vmatpush1.msra.mxu0 0.0
      %537 = vmatprep.subr.mxu0 0.0
      %538 = vmatpush1.msra.mxu0 0.0
      %539 = vmatprep.subr.mxu0 0.0
      %540 = vmatpush1.msra.mxu0 0.0
      %541 = vmatprep.subr.mxu0 0.0
      %542 = vmatpush1.msra.mxu0 0.0
      %543 = vmatprep.subr.mxu0 0.0
      %544 = vmatpush1.msra.mxu0 0.0
      %545 = vmatprep.subr.mxu0 0.0
      %546 = vmatpush1.msra.mxu0 0.0
      %547 = vmatprep.subr.mxu0 0.0
      %548 = vmatpush1.msra.mxu0 0.0
      %549 = vmatprep.subr.mxu0 0.0
      %550 = vmatpush1.msra.mxu0 0.0
      %551 = vmatprep.subr.mxu0 0.0
      %552 = vmatpush1.msra.mxu0 0.0
      %553 = vmatprep.subr.mxu0 0.0
      %554 = vmatpush1.msra.mxu0 0.0
      %555 = vmatprep.subr.mxu0 0.0
      %556 = vmatpush1.msra.mxu0 0.0
      %557 = vmatprep.subr.mxu0 0.0
      %558 = vmatpush1.msra.mxu0 0.0
      %559 = vmatprep.subr.mxu0 0.0
      %560 = vmatpush1.msra.mxu0 0.0
      %561 = vmatprep.subr.mxu0 0.0
      %562 = vmatpush1.msra.mxu0 0.0
      %563 = vmatprep.subr.mxu0 0.0
      %564 = vmatpush1.msra.mxu0 0.0
      %565 = vmatprep.subr.mxu0 0.0
      %566 = vmatpush1.msra.mxu0 0.0
      %567 = vmatprep.subr.mxu0 0.0
      %568 = vmatpush1.msra.mxu0 0.0
      %569 = vmatprep.subr.mxu0 0.0
      %570 = vmatpush1.msra.mxu0 0.0
      %571 = vmatprep.subr.mxu0 0.0
      %572 = vmatpush1.msra.mxu0 0.0
      %573 = vmatprep.subr.mxu0 0.0
      %574 = vmatpush1.msra.mxu0 0.0
      %575 = vmatprep.subr.mxu0 0.0
      %576 = vmatpush1.msra.mxu0 0.0
      %577 = vmatprep.subr.mxu0 0.0
      %578 = vmatpush1.msra.mxu0 0.0
      %579 = vmatprep.subr.mxu0 0.0
      %580 = vmatpush1.msra.mxu0 0.0
      %581 = vmatprep.subr.mxu0 0.0
      %582 = vmatpush1.msra.mxu0 0.0
      %583 = vmatprep.subr.mxu0 0.0
      %584 = vmatpush1.msra.mxu0 0.0
      %585 = vmatprep.subr.mxu0 0.0
      %586 = vmatpush1.msra.mxu0 0.0
      %587 = vmatprep.subr.mxu0 0.0
      %588 = vmatpush1.msra.mxu0 0.0
      %589 = vmatprep.subr.mxu0 0.0
      %590 = vmatpush1.msra.mxu0 0.0
      %591 = vmatprep.subr.mxu0 0.0
      %592 = vmatpush1.msra.mxu0 0.0
      %593 = vmatprep.mubr.f32.mxu0 0.0
      %594 = vmatmul.mubr.f32.gmra.mrb[0].mxu0 %v523
      %v595 = vpop.f32.mrb[0].mxu0
      %v596 = vadd.f32 %v520, %v595
      %v597 = vpop.f32.mrb[0].mxu0
      %598 = vdwg.mxu0
      %v599 = vld [vmem:[%s0 + $0x68] sm:$0xf]
      %v601 = vsel %vm521, %v596, 0
      %v604 = vsel %vm525, %v599, 0
      %606 = vmatprep.subr.mxu0 0.0
      %607 = vmatpush1.msra.mxu0 %v604
      %608 = vmatprep.subr.mxu0 0.0
      %609 = vmatpush1.msra.mxu0 0.0
      %610 = vmatprep.subr.mxu0 0.0
      %611 = vmatpush1.msra.mxu0 0.0
      %612 = vmatprep.subr.mxu0 0.0
      %613 = vmatpush1.msra.mxu0 0.0
      %614 = vmatprep.subr.mxu0 0.0
      %615 = vmatpush1.msra.mxu0 0.0
      %616 = vmatprep.subr.mxu0 0.0
      %617 = vmatpush1.msra.mxu0 0.0
      %618 = vmatprep.subr.mxu0 0.0
      %619 = vmatpush1.msra.mxu0 0.0
      %620 = vmatprep.subr.mxu0 0.0
      %621 = vmatpush1.msra.mxu0 0.0
      %622 = vmatprep.subr.mxu0 0.0
      %623 = vmatpush1.msra.mxu0 0.0
      %624 = vmatprep.subr.mxu0 0.0
      %625 = vmatpush1.msra.mxu0 0.0
      %626 = vmatprep.subr.mxu0 0.0
      %627 = vmatpush1.msra.mxu0 0.0
      %628 = vmatprep.subr.mxu0 0.0
      %629 = vmatpush1.msra.mxu0 0.0
      %630 = vmatprep.subr.mxu0 0.0
      %631 = vmatpush1.msra.mxu0 0.0
      %632 = vmatprep.subr.mxu0 0.0
      %633 = vmatpush1.msra.mxu0 0.0
      %634 = vmatprep.subr.mxu0 0.0
      %635 = vmatpush1.msra.mxu0 0.0
      %636 = vmatprep.subr.mxu0 0.0
      %637 = vmatpush1.msra.mxu0 0.0
      %638 = vmatprep.subr.mxu0 0.0
      %639 = vmatpush1.msra.mxu0 0.0
      %640 = vmatprep.subr.mxu0 0.0
      %641 = vmatpush1.msra.mxu0 0.0
      %642 = vmatprep.subr.mxu0 0.0
      %643 = vmatpush1.msra.mxu0 0.0
      %644 = vmatprep.subr.mxu0 0.0
      %645 = vmatpush1.msra.mxu0 0.0
      %646 = vmatprep.subr.mxu0 0.0
      %647 = vmatpush1.msra.mxu0 0.0
      %648 = vmatprep.subr.mxu0 0.0
      %649 = vmatpush1.msra.mxu0 0.0
      %650 = vmatprep.subr.mxu0 0.0
      %651 = vmatpush1.msra.mxu0 0.0
      %652 = vmatprep.subr.mxu0 0.0
      %653 = vmatpush1.msra.mxu0 0.0
      %654 = vmatprep.subr.mxu0 0.0
      %655 = vmatpush1.msra.mxu0 0.0
      %656 = vmatprep.subr.mxu0 0.0
      %657 = vmatpush1.msra.mxu0 0.0
      %658 = vmatprep.subr.mxu0 0.0
      %659 = vmatpush1.msra.mxu0 0.0
      %660 = vmatprep.subr.mxu0 0.0
      %661 = vmatpush1.msra.mxu0 0.0
      %662 = vmatprep.subr.mxu0 0.0
      %663 = vmatpush1.msra.mxu0 0.0
      %664 = vmatprep.subr.mxu0 0.0
      %665 = vmatpush1.msra.mxu0 0.0
      %666 = vmatprep.subr.mxu0 0.0
      %667 = vmatpush1.msra.mxu0 0.0
      %668 = vmatprep.subr.mxu0 0.0
      %669 = vmatpush1.msra.mxu0 0.0
      %670 = vmatprep.mubr.f32.mxu0 0.0
      %671 = vmatmul.mubr.f32.gmra.mrb[0].mxu0 %v601
      %v672 = vpop.f32.mrb[0].mxu0
      %v673 = vadd.f32 0.0, %v672
      %v674 = vpop.f32.mrb[0].mxu0
      %675 = vdwg.mxu0
      %v676 = vld [vmem:[%s0 + $0x70] sm:$0xf]
      %v678 = vsel %vm525, %v676, 0
      %680 = vmatprep.subr.mxu0 0.0
      %681 = vmatpush1.msra.mxu0 %v678
      %682 = vmatprep.subr.mxu0 0.0
      %683 = vmatpush1.msra.mxu0 0.0
      %684 = vmatprep.subr.mxu0 0.0
      %685 = vmatpush1.msra.mxu0 0.0
      %686 = vmatprep.subr.mxu0 0.0
      %687 = vmatpush1.msra.mxu0 0.0
      %688 = vmatprep.subr.mxu0 0.0
      %689 = vmatpush1.msra.mxu0 0.0
      %690 = vmatprep.subr.mxu0 0.0
      %691 = vmatpush1.msra.mxu0 0.0
      %692 = vmatprep.subr.mxu0 0.0
      %693 = vmatpush1.msra.mxu0 0.0
      %694 = vmatprep.subr.mxu0 0.0
      %695 = vmatpush1.msra.mxu0 0.0
      %696 = vmatprep.subr.mxu0 0.0
      %697 = vmatpush1.msra.mxu0 0.0
      %698 = vmatprep.subr.mxu0 0.0
      %699 = vmatpush1.msra.mxu0 0.0
      %700 = vmatprep.subr.mxu0 0.0
      %701 = vmatpush1.msra.mxu0 0.0
      %702 = vmatprep.subr.mxu0 0.0
      %703 = vmatpush1.msra.mxu0 0.0
      %704 = vmatprep.subr.mxu0 0.0
      %705 = vmatpush1.msra.mxu0 0.0
      %706 = vmatprep.subr.mxu0 0.0
      %707 = vmatpush1.msra.mxu0 0.0
      %708 = vmatprep.subr.mxu0 0.0
      %709 = vmatpush1.msra.mxu0 0.0
      %710 = vmatprep.subr.mxu0 0.0
      %711 = vmatpush1.msra.mxu0 0.0
      %712 = vmatprep.subr.mxu0 0.0
      %713 = vmatpush1.msra.mxu0 0.0
      %714 = vmatprep.subr.mxu0 0.0
      %715 = vmatpush1.msra.mxu0 0.0
      %716 = vmatprep.subr.mxu0 0.0
      %717 = vmatpush1.msra.mxu0 0.0
      %718 = vmatprep.subr.mxu0 0.0
      %719 = vmatpush1.msra.mxu0 0.0
      %720 = vmatprep.subr.mxu0 0.0
      %721 = vmatpush1.msra.mxu0 0.0
      %722 = vmatprep.subr.mxu0 0.0
      %723 = vmatpush1.msra.mxu0 0.0
      %724 = vmatprep.subr.mxu0 0.0
      %725 = vmatpush1.msra.mxu0 0.0
      %726 = vmatprep.subr.mxu0 0.0
      %727 = vmatpush1.msra.mxu0 0.0
      %728 = vmatprep.subr.mxu0 0.0
      %729 = vmatpush1.msra.mxu0 0.0
      %730 = vmatprep.subr.mxu0 0.0
      %731 = vmatpush1.msra.mxu0 0.0
      %732 = vmatprep.subr.mxu0 0.0
      %733 = vmatpush1.msra.mxu0 0.0
      %734 = vmatprep.subr.mxu0 0.0
      %735 = vmatpush1.msra.mxu0 0.0
      %736 = vmatprep.subr.mxu0 0.0
      %737 = vmatpush1.msra.mxu0 0.0
      %738 = vmatprep.subr.mxu0 0.0
      %739 = vmatpush1.msra.mxu0 0.0
      %740 = vmatprep.subr.mxu0 0.0
      %741 = vmatpush1.msra.mxu0 0.0
      %742 = vmatprep.subr.mxu0 0.0
      %743 = vmatpush1.msra.mxu0 0.0
      %744 = vmatprep.mubr.f32.mxu0 0.0
      %745 = vmatmul.mubr.f32.gmra.mrb[0].mxu0 %v601
      %v746 = vpop.f32.mrb[0].mxu0
      %v747 = vadd.f32 0.0, %v746
      %v748 = vpop.f32.mrb[0].mxu0
      %749 = vdwg.mxu0
      %v750 = vmul.f32 %v673, %v747
      %v751 = vmul.f32 %v596, %v596
      %v752 = vsel %vm482, %v751, 0.0
      %753 = vadd.xlane.f32.xlu0 %v752
      %v754 = vpop.xlane.xlu0 %753
      %v755 = vld [vmem:[%s0 + $0x78] sm:$0xff]
      %v756 = vld [vmem:[%s0 + $0x80] sm:$0xff]
      %v758 = vsel %vm291, %v750, 0
      %760 = vmatprep.subr.mxu0 0.0
      %761 = vmatpush1.msra.mxu0 %v755
      %762 = vmatprep.subr.mxu0 0.0
      %763 = vmatpush1.msra.mxu0 %v756
      %764 = vmatprep.subr.mxu0 0.0
      %765 = vmatpush1.msra.mxu0 0.0
      %766 = vmatprep.subr.mxu0 0.0
      %767 = vmatpush1.msra.mxu0 0.0
      %768 = vmatprep.subr.mxu0 0.0
      %769 = vmatpush1.msra.mxu0 0.0
      %770 = vmatprep.subr.mxu0 0.0
      %771 = vmatpush1.msra.mxu0 0.0
      %772 = vmatprep.subr.mxu0 0.0
      %773 = vmatpush1.msra.mxu0 0.0
      %774 = vmatprep.subr.mxu0 0.0
      %775 = vmatpush1.msra.mxu0 0.0
      %776 = vmatprep.subr.mxu0 0.0
      %777 = vmatpush1.msra.mxu0 0.0
      %778 = vmatprep.subr.mxu0 0.0
      %779 = vmatpush1.msra.mxu0 0.0
      %780 = vmatprep.subr.mxu0 0.0
      %781 = vmatpush1.msra.mxu0 0.0
      %782 = vmatprep.subr.mxu0 0.0
      %783 = vmatpush1.msra.mxu0 0.0
      %784 = vmatprep.subr.mxu0 0.0
      %785 = vmatpush1.msra.mxu0 0.0
      %786 = vmatprep.subr.mxu0 0.0
      %787 = vmatpush1.msra.mxu0 0.0
      %788 = vmatprep.subr.mxu0 0.0
      %789 = vmatpush1.msra.mxu0 0.0
      %790 = vmatprep.subr.mxu0 0.0
      %791 = vmatpush1.msra.mxu0 0.0
      %792 = vmatprep.subr.mxu0 0.0
      %793 = vmatpush1.msra.mxu0 0.0
      %794 = vmatprep.subr.mxu0 0.0
      %795 = vmatpush1.msra.mxu0 0.0
      %796 = vmatprep.subr.mxu0 0.0
      %797 = vmatpush1.msra.mxu0 0.0
      %798 = vmatprep.subr.mxu0 0.0
      %799 = vmatpush1.msra.mxu0 0.0
      %800 = vmatprep.subr.mxu0 0.0
      %801 = vmatpush1.msra.mxu0 0.0
      %802 = vmatprep.subr.mxu0 0.0
      %803 = vmatpush1.msra.mxu0 0.0
      %804 = vmatprep.subr.mxu0 0.0
      %805 = vmatpush1.msra.mxu0 0.0
      %806 = vmatprep.subr.mxu0 0.0
      %807 = vmatpush1.msra.mxu0 0.0
      %808 = vmatprep.subr.mxu0 0.0
      %809 = vmatpush1.msra.mxu0 0.0
      %810 = vmatprep.subr.mxu0 0.0
      %811 = vmatpush1.msra.mxu0 0.0
      %812 = vmatprep.subr.mxu0 0.0
      %813 = vmatpush1.msra.mxu0 0.0
      %814 = vmatprep.subr.mxu0 0.0
      %815 = vmatpush1.msra.mxu0 0.0
      %816 = vmatprep.subr.mxu0 0.0
      %817 = vmatpush1.msra.mxu0 0.0
      %818 = vmatprep.subr.mxu0 0.0
      %819 = vmatpush1.msra.mxu0 0.0
      %820 = vmatprep.subr.mxu0 0.0
      %821 = vmatpush1.msra.mxu0 0.0
      %822 = vmatprep.subr.mxu0 0.0
      %823 = vmatpush1.msra.mxu0 0.0
      %824 = vmatprep.mubr.f32.mxu0 0.0
      %825 = vmatmul.mubr.f32.gmra.mrb[0].mxu0 %v758
      %v826 = vpop.f32.mrb[0].mxu0
      %v827 = vadd.f32 0.0, %v826
      %v828 = vpop.f32.mrb[0].mxu0
      %829 = vdwg.mxu0
      %v830 = vrcp.pop %v754
      %v831 = vmul.f32 %v827, %v830
      %v832 = vld [vmem:[%s0 + $0x60] sm:$0xf]
      %v833 = vld [vmem:[%s0 + $0xd8] sm:$0x1]
      %v834 = vlaneseq
      %v835 = vshrl.u32 %v834, 7
      %v836 = vsub.s32 0, %v835
      %v837 = vrot.slane %v833, %v836
      %v839 = vsel %vm525, %v832, 0
      %841 = vmatprep.subr.mxu0 0.0
      %842 = vmatpush1.msra.mxu0 %v839
      %843 = vmatprep.subr.mxu0 0.0
      %844 = vmatpush1.msra.mxu0 0.0
      %845 = vmatprep.subr.mxu0 0.0
      %846 = vmatpush1.msra.mxu0 0.0
      %847 = vmatprep.subr.mxu0 0.0
      %848 = vmatpush1.msra.mxu0 0.0
      %849 = vmatprep.subr.mxu0 0.0
      %850 = vmatpush1.msra.mxu0 0.0
      %851 = vmatprep.subr.mxu0 0.0
      %852 = vmatpush1.msra.mxu0 0.0
      %853 = vmatprep.subr.mxu0 0.0
      %854 = vmatpush1.msra.mxu0 0.0
      %855 = vmatprep.subr.mxu0 0.0
      %856 = vmatpush1.msra.mxu0 0.0
      %857 = vmatprep.subr.mxu0 0.0
      %858 = vmatpush1.msra.mxu0 0.0
      %859 = vmatprep.subr.mxu0 0.0
      %860 = vmatpush1.msra.mxu0 0.0
      %861 = vmatprep.subr.mxu0 0.0
      %862 = vmatpush1.msra.mxu0 0.0
      %863 = vmatprep.subr.mxu0 0.0
      %864 = vmatpush1.msra.mxu0 0.0
      %865 = vmatprep.subr.mxu0 0.0
      %866 = vmatpush1.msra.mxu0 0.0
      %867 = vmatprep.subr.mxu0 0.0
      %868 = vmatpush1.msra.mxu0 0.0
      %869 = vmatprep.subr.mxu0 0.0
      %870 = vmatpush1.msra.mxu0 0.0
      %871 = vmatprep.subr.mxu0 0.0
      %872 = vmatpush1.msra.mxu0 0.0
      %873 = vmatprep.subr.mxu0 0.0
      %874 = vmatpush1.msra.mxu0 0.0
      %875 = vmatprep.subr.mxu0 0.0
      %876 = vmatpush1.msra.mxu0 0.0
      %877 = vmatprep.subr.mxu0 0.0
      %878 = vmatpush1.msra.mxu0 0.0
      %879 = vmatprep.subr.mxu0 0.0
      %880 = vmatpush1.msra.mxu0 0.0
      %881 = vmatprep.subr.mxu0 0.0
      %882 = vmatpush1.msra.mxu0 0.0
      %883 = vmatprep.subr.mxu0 0.0
      %884 = vmatpush1.msra.mxu0 0.0
      %885 = vmatprep.subr.mxu0 0.0
      %886 = vmatpush1.msra.mxu0 0.0
      %887 = vmatprep.subr.mxu0 0.0
      %888 = vmatpush1.msra.mxu0 0.0
      %889 = vmatprep.subr.mxu0 0.0
      %890 = vmatpush1.msra.mxu0 0.0
      %891 = vmatprep.subr.mxu0 0.0
      %892 = vmatpush1.msra.mxu0 0.0
      %893 = vmatprep.subr.mxu0 0.0
      %894 = vmatpush1.msra.mxu0 0.0
      %895 = vmatprep.subr.mxu0 0.0
      %896 = vmatpush1.msra.mxu0 0.0
      %897 = vmatprep.subr.mxu0 0.0
      %898 = vmatpush1.msra.mxu0 0.0
      %899 = vmatprep.subr.mxu0 0.0
      %900 = vmatpush1.msra.mxu0 0.0
      %901 = vmatprep.subr.mxu0 0.0
      %902 = vmatpush1.msra.mxu0 0.0
      %903 = vmatprep.subr.mxu0 0.0
      %904 = vmatpush1.msra.mxu0 0.0
      %905 = vmatprep.mubr.f32.mxu0 0.0
      %906 = vmatmul.mubr.f32.gmra.mrb[0].mxu0 %v523
      %v907 = vpop.f32.mrb[0].mxu0
      %v908 = vadd.f32 %v837, %v907
      %v909 = vpop.f32.mrb[0].mxu0
      %910 = vdwg.mxu0
      %v911 = vadd.f32 %v831, %v908
      %912 = vst.msk [vmem:[#allocation4] sm:$0x3] %vm250, %v911
    $region21: #{tpu_custom_call.1} parent=1 // pred_fallthru
      _
    // Predicated region
    $region22: #{tpu_custom_call.1} parent=1 // pred_check
      _
    $region23: #{tpu_custom_call.1} parent=1 // pred_check_branch
      %914 = sbr.rel (0) target = $region25
    $region24: #{tpu_custom_call.1} parent=1 // pred_region
      %s916 = ssub.s32 32, 32
      %917 = vsyncadd [#allocation5], %s916
      %s919 = sshll.u32 [#allocation4], 4
      %s920 = int_to_ptr.vmem [resolvable:$true] %s919
      %922 = dma.vmem_to_hbm [thread:$0]  %s920, 32, %s3, [#allocation5]
    $region25: #{tpu_custom_call.1} parent=1 // pred_fallthru
      _
    // Predicated region
    $region26: #{tpu_custom_call.1} parent=1 // pred_check
      _
    $region27: #{tpu_custom_call.1} parent=1 // pred_check_branch
      %924 = sbr.rel (0) target = $region29
    $region28: #{tpu_custom_call.1} parent=1 // pred_region
      %925 = dma.done [#allocation5], 32
    $region29: #{tpu_custom_call.1} parent=1 // pred_fallthru
      _
    %926 = vsyncpa [#allocation5], 1

</llo_original>
